<compile_context>
chip_gen: v5e
topology: v5e:2x2
jax: 0.10.0
libtpu: 0.0.40
codegen_flags: <defaults>
</compile_context>

<pallas_src>
import functools

import jax
import jax.numpy as jnp
from jax import lax
from jax.experimental import pallas as pl
from jax.experimental.pallas import tpu as pltpu

# ---- static problem sizes (net[4] is Linear(N, .), so N is fixed by the pretrained model) ----
N = 16            # nodes per graph
FEAT = 8          # node feature dim
HIDDEN = 32       # GCN hidden dim
NUM_CLASSES = 4   # out dim of net[3]
HIDDEN2 = 16      # out dim of net[4]
C_OUT = 4         # out dim of net[5]

# padded dims so each graph's logits land on full (8, 128) tiles -> unmasked lane-dense stores
C_PAD = 8
OUT_PAD = 128
NEG_BIG = -1e30   # bias pad so padded logits contribute exp(.) == 0 to the softmax sum

LANES = 128
# weight-slab row offsets (16-row aligned: bf16 packs 16 rows per vreg)
R_W1, R_W2, R_W3, R_W4, R_W5, R_W6 = 0, 16, 48, 80, 112, 128
W_ROWS = 144
B_ROWS = 8


def _feature_extractor_kernel(adj_ref, x_ref, w_ref, b_ref, out_ref, *, G):
    bf16 = jnp.bfloat16
    f32 = jnp.float32

    adj = adj_ref[0]                                   # [G*N, G*N] bf16 block-diagonal
    x = x_ref[0]                                       # [G*N, FEAT] bf16

    # carve the VMEM-resident slabs with static slices (amortized over G graphs per step)
    w1 = w_ref[R_W1:R_W1 + FEAT,    0:HIDDEN]
    w2 = w_ref[R_W2:R_W2 + HIDDEN,  0:HIDDEN]
    w3 = w_ref[R_W3:R_W3 + HIDDEN,  0:HIDDEN]
    w4 = w_ref[R_W4:R_W4 + HIDDEN,  0:C_PAD]
    w5 = w_ref[R_W5:R_W5 + N,       0:HIDDEN2]
    w6 = w_ref[R_W6:R_W6 + HIDDEN2, 0:OUT_PAD]

    b1 = b_ref[0:1, 0:HIDDEN]
    b2 = b_ref[1:2, 0:HIDDEN]
    b3 = b_ref[2:3, 0:HIDDEN]
    b4 = b_ref[3:4, 0:C_PAD]
    b5 = b_ref[4:5, 0:HIDDEN2]
    b6 = b_ref[5:6, 0:OUT_PAD]

    def gcn(h_bf, w, b):
        # both matmuls see M = G*N rows; block-diagonal adj keeps graphs independent
        ah = jnp.dot(adj, h_bf, preferred_element_type=f32)
        h = jnp.dot(ah.astype(bf16), w, preferred_element_type=f32) + b
        return jnp.maximum(h, 0.0).astype(bf16)        # relu in f32, single cast per layer

    h = gcn(x, w1, b1)                                 # [G*N, H] bf16
    h = gcn(h, w2, b2)
    h = gcn(h, w3, b3)

    # net[3]: one stacked Linear(H -> C_PAD) for all G graphs
    s = (jnp.dot(h, w4, preferred_element_type=f32) + b4).astype(bf16)      # [G*N, C_PAD]

    # net[4]: torch.t fused into per-graph trans_a matmuls (contract dim 0 of both).
    # The head is ~1% of the FLOPs; unroll the tiny per-graph part statically.
    t_rows = []
    for g in range(G):
        s_g = s[g * N:(g + 1) * N, :]                  # [N, C_PAD], 16-row-aligned static slice
        t_g = lax.dot_general(s_g, w5,
                              dimension_numbers=(((0,), (0,)), ((), ())),
                              preferred_element_type=f32) + b5              # [C_PAD, H2]
        t_rows.append(jnp.maximum(t_g, 0.0))
    t = jnp.concatenate(t_rows, axis=0).astype(bf16)   # [G*C_PAD, H2]

    # net[5] + log_softmax once for all graphs; padded lanes carry bias NEG_BIG
    z = jnp.dot(t, w6, preferred_element_type=f32) + b6                     # [G*C_PAD, OUT_PAD]
    m = jnp.max(z, axis=1, keepdims=True)
    zc = z - m
    lse = jnp.log(jnp.sum(jnp.exp(zc), axis=1, keepdims=True))
    out_ref[0] = zc - lse                              # single unmasked (G*C_PAD, 128) store


def pack_weight_slab(p):
    """All weight matrices -> one lane-dense bf16 slab [W_ROWS, 128]."""
    w = jnp.zeros((W_ROWS, LANES), jnp.bfloat16)
    w = w.at[R_W1:R_W1 + FEAT,    0:HIDDEN].set(p["w1"].astype(jnp.bfloat16))
    w = w.at[R_W2:R_W2 + HIDDEN,  0:HIDDEN].set(p["w2"].astype(jnp.bfloat16))
    w = w.at[R_W3:R_W3 + HIDDEN,  0:HIDDEN].set(p["w3"].astype(jnp.bfloat16))
    w = w.at[R_W4:R_W4 + HIDDEN,  0:NUM_CLASSES].set(p["w4"].astype(jnp.bfloat16))
    w = w.at[R_W5:R_W5 + N,       0:HIDDEN2].set(p["w5"].astype(jnp.bfloat16))
    w = w.at[R_W6:R_W6 + HIDDEN2, 0:C_OUT].set(p["w6"].astype(jnp.bfloat16))
    return w


def pack_bias_slab(p):
    """All biases -> one f32 slab [8, 128]; b6 padded lanes get NEG_BIG."""
    b = jnp.zeros((B_ROWS, LANES), jnp.float32)
    b = b.at[0, 0:HIDDEN].set(p["b1"].reshape(-1))
    b = b.at[1, 0:HIDDEN].set(p["b2"].reshape(-1))
    b = b.at[2, 0:HIDDEN].set(p["b3"].reshape(-1))
    b = b.at[3, 0:NUM_CLASSES].set(p["b4"].reshape(-1))
    b = b.at[4, 0:HIDDEN2].set(p["b5"].reshape(-1))
    b = b.at[5, :].set(jnp.full((LANES,), NEG_BIG, jnp.float32))
    b = b.at[5, 0:C_OUT].set(p["b6"].reshape(-1))
    return b


def _choose_group_size(batch):
    """Graphs per grid step: largest divisor of batch with G*N <= 256 (MXU rows),
    preferring >= 2 grid steps so v7x's two TensorCores both get work."""
    divs = [g for g in range(1, batch + 1) if batch % g == 0 and g * N <= 256]
    multi = [g for g in divs if batch // g >= 2]
    return max(multi) if multi else max(divs)


@jax.jit
def feature_extractor_forward(adj_hat, features, w_slab, b_slab):
    """adj_hat: [B, N, N] bf16, features: [B, N, FEAT] bf16 -> [B, NUM_CLASSES, C_OUT] f32."""
    B = adj_hat.shape[0]
    G = _choose_group_size(B)
    S = B // G
    GN = G * N

    # block-diagonal adjacency + row-stacked features: one dense DMA per step and
    # every GCN matmul runs with M = GN rows instead of 16
    blocks = adj_hat.reshape(S, G, N, N)
    bd = jnp.zeros((S, GN, GN), adj_hat.dtype)
    for g in range(G):
        bd = bd.at[:, g * N:(g + 1) * N, g * N:(g + 1) * N].set(blocks[:, g])
    x = features.reshape(S, GN, FEAT)

    flops = 2 * S * (GN * GN * FEAT + GN * FEAT * HIDDEN
                     + 2 * (GN * GN * HIDDEN + GN * HIDDEN * HIDDEN)
                     + GN * HIDDEN * C_PAD
                     + G * N * C_PAD * HIDDEN2
                     + G * C_PAD * HIDDEN2 * OUT_PAD)
    transcendentals = S * (G * C_PAD * OUT_PAD + G * C_PAD)
    bytes_accessed = int(bd.size * 2 + x.size * 2
                         + w_slab.size * 2 + b_slab.size * 4
                         + S * G * C_PAD * OUT_PAD * 4)

    out = pl.pallas_call(
        functools.partial(_feature_extractor_kernel, G=G),
        grid=(S,),
        in_specs=[
            pl.BlockSpec((1, GN, GN), lambda s: (s, 0, 0)),      # per-step block-diag adjacency
            pl.BlockSpec((1, GN, FEAT), lambda s: (s, 0, 0)),    # per-step stacked features
            pl.BlockSpec((W_ROWS, LANES), lambda s: (0, 0)),     # weight slab, VMEM-resident
            pl.BlockSpec((B_ROWS, LANES), lambda s: (0, 0)),     # bias slab, VMEM-resident
        ],
        out_specs=pl.BlockSpec((1, G * C_PAD, OUT_PAD), lambda s: (s, 0, 0)),
        out_shape=jax.ShapeDtypeStruct((S, G * C_PAD, OUT_PAD), jnp.float32),
        compiler_params=pltpu.CompilerParams(
            dimension_semantics=("parallel",)),
        cost_estimate=pl.CostEstimate(
            flops=flops, transcendentals=transcendentals,
            bytes_accessed=bytes_accessed),
    )(bd, x, w_slab, b_slab)

    # strip class-row and lane padding; restore per-graph leading axis
    out = out.reshape(B, C_PAD, OUT_PAD)
    return out[:, :NUM_CLASSES, :C_OUT]


def make_params(key, feat_dim, hidden, num_nodes, num_classes, hidden2, c_out):
    ks = jax.random.split(key, 12)
    def w(k, shape):
        return (0.1 * jax.random.normal(k, shape)).astype(jnp.float32)
    return {
        "w1": w(ks[0], (feat_dim, hidden)),    "b1": w(ks[1], (1, hidden)),
        "w2": w(ks[2], (hidden, hidden)),      "b2": w(ks[3], (1, hidden)),
        "w3": w(ks[4], (hidden, hidden)),      "b3": w(ks[5], (1, hidden)),
        "w4": w(ks[6], (hidden, num_classes)), "b4": w(ks[7], (1, num_classes)),
        "w5": w(ks[8], (num_nodes, hidden2)),  "b5": w(ks[9], (1, hidden2)),
        "w6": w(ks[10], (hidden2, c_out)),     "b6": w(ks[11], (1, c_out)),
    }


def reference_forward(adj_b, x_b, p):
    """Pure-JAX reference mirroring the kernel's bf16-input / f32-accumulate precision path."""
    bf = lambda a: a.astype(jnp.bfloat16)
    dot = lambda a, b: jnp.dot(a, b, preferred_element_type=jnp.float32)
    h = dot(bf(adj_b), bf(x_b))
    h = jnp.maximum(dot(bf(h), bf(p["w1"])) + p["b1"], 0.0)
    h = jnp.maximum(dot(bf(dot(bf(adj_b), bf(h))), bf(p["w2"])) + p["b2"], 0.0)
    h = jnp.maximum(dot(bf(dot(bf(adj_b), bf(h))), bf(p["w3"])) + p["b3"], 0.0)
    s = dot(bf(h), bf(p["w4"])) + p["b4"]          # [N, C]
    s = s.T                                        # [C, N]  (torch.t)
    t = jnp.maximum(dot(bf(s), bf(p["w5"])) + p["b5"], 0.0)
    z = dot(bf(t), bf(p["w6"])) + p["b6"]          # [C, C_out]
    return jax.nn.log_softmax(z, axis=1)


if __name__ == "__main__":
    BATCH = 8
    key = jax.random.PRNGKey(0)
    k_adj, k_feat, k_par = jax.random.split(key, 3)

    # random symmetric binary adjacencies; GCN normalization A_hat = D^-1/2 (A + I) D^-1/2
    a = (jax.random.uniform(k_adj, (BATCH, N, N)) < 0.25).astype(jnp.float32)
    a = jnp.maximum(a, jnp.transpose(a, (0, 2, 1)))
    eye = jnp.eye(N, dtype=jnp.float32)
    a = a * (1.0 - eye) + eye
    deg = jnp.sum(a, axis=2)
    d_inv_sqrt = 1.0 / jnp.sqrt(deg)
    adj_hat = a * d_inv_sqrt[:, :, None] * d_inv_sqrt[:, None, :]

    features = jax.random.normal(k_feat, (BATCH, N, FEAT), dtype=jnp.float32)
    params = make_params(k_par, FEAT, HIDDEN, N, NUM_CLASSES, HIDDEN2, C_OUT)

    # bf16 inputs (MXU-native); accumulation stays f32 in-kernel
    adj_b = adj_hat.astype(jnp.bfloat16)
    x_b = features.astype(jnp.bfloat16)
    w_slab = pack_weight_slab(params)
    b_slab = pack_bias_slab(params)

    out = feature_extractor_forward(adj_b, x_b, w_slab, b_slab)
    out = jax.block_until_ready(out)

    assert out.shape == (BATCH, NUM_CLASSES, C_OUT)

    # log_softmax rows should sum (in prob space) to ~1
    row_prob = jnp.sum(jnp.exp(out), axis=2)
    assert bool(jnp.all(jnp.abs(row_prob - 1.0) < 1e-4))

    # compare against the pure-JAX reference (same precision path)
    ref = jax.vmap(lambda ad, xx: reference_forward(ad, xx, params))(adj_b, x_b)
    max_err = float(jnp.max(jnp.abs(out - ref)))
    assert max_err < 1e-2, f"max abs err vs reference: {max_err}"

    print("KERNEL_OK")
</pallas_src>

<mosaic_0001>
module attributes {stable_mosaic.version = 11 : i64} {
  func.func @_feature_extractor_kernel(%arg0: i32, %arg1: memref<1x64x64xbf16, #tpu.memory_space<vmem>>, %arg2: memref<1x64x8xbf16, #tpu.memory_space<vmem>>, %arg3: memref<144x128xbf16, #tpu.memory_space<vmem>>, %arg4: memref<8x128xf32, #tpu.memory_space<vmem>>, %arg5: memref<1x32x128xf32, #tpu.memory_space<vmem>>) attributes {dimension_semantics = [#tpu.dimension_semantics<parallel>], iteration_bounds = array<i64: 2>, scalar_prefetch = 0 : i64, scratch_operands = 0 : i64, tpu.core_type = #tpu.core_type<tc>, window_params = [{transform_indices = @transform_0, window_bounds = array<i64: 1, 64, 64>}, {transform_indices = @transform_1, window_bounds = array<i64: 1, 64, 8>}, {pipeline_mode = #tpu.pipeline_mode<synchronous>, transform_indices = @transform_2, window_bounds = array<i64: 144, 128>}, {pipeline_mode = #tpu.pipeline_mode<synchronous>, transform_indices = @transform_3, window_bounds = array<i64: 8, 128>}, {transform_indices = @transform_4, window_bounds = array<i64: 1, 32, 128>}]} {
    %c0 = arith.constant 0 : index
    %c0_0 = arith.constant 0 : index
    %c0_1 = arith.constant 0 : index
    %0 = vector.load %arg1[%c0, %c0_0, %c0_1] : memref<1x64x64xbf16, #tpu.memory_space<vmem>>, vector<1x64x64xbf16>
    %1 = vector.shape_cast %0 : vector<1x64x64xbf16> to vector<64x64xbf16>
    %c0_2 = arith.constant 0 : index
    %c0_3 = arith.constant 0 : index
    %c0_4 = arith.constant 0 : index
    %2 = vector.load %arg2[%c0_2, %c0_3, %c0_4] : memref<1x64x8xbf16, #tpu.memory_space<vmem>>, vector<1x64x8xbf16>
    %3 = vector.shape_cast %2 : vector<1x64x8xbf16> to vector<64x8xbf16>
    %c0_5 = arith.constant 0 : index
    %c0_6 = arith.constant 0 : index
    %4 = vector.load %arg3[%c0_5, %c0_6] : memref<144x128xbf16, #tpu.memory_space<vmem>>, vector<8x32xbf16>
    %c16 = arith.constant 16 : index
    %c0_7 = arith.constant 0 : index
    %5 = vector.load %arg3[%c16, %c0_7] : memref<144x128xbf16, #tpu.memory_space<vmem>>, vector<32x32xbf16>
    %c48 = arith.constant 48 : index
    %c0_8 = arith.constant 0 : index
    %6 = vector.load %arg3[%c48, %c0_8] : memref<144x128xbf16, #tpu.memory_space<vmem>>, vector<32x32xbf16>
    %c80 = arith.constant 80 : index
    %c0_9 = arith.constant 0 : index
    %7 = vector.load %arg3[%c80, %c0_9] : memref<144x128xbf16, #tpu.memory_space<vmem>>, vector<32x8xbf16>
    %c112 = arith.constant 112 : index
    %c0_10 = arith.constant 0 : index
    %8 = vector.load %arg3[%c112, %c0_10] : memref<144x128xbf16, #tpu.memory_space<vmem>>, vector<16x16xbf16>
    %c128 = arith.constant 128 : index
    %c0_11 = arith.constant 0 : index
    %9 = vector.load %arg3[%c128, %c0_11] : memref<144x128xbf16, #tpu.memory_space<vmem>>, vector<16x128xbf16>
    %c0_12 = arith.constant 0 : index
    %c0_13 = arith.constant 0 : index
    %10 = vector.load %arg4[%c0_12, %c0_13] : memref<8x128xf32, #tpu.memory_space<vmem>>, vector<1x32xf32>
    %c1 = arith.constant 1 : index
    %c0_14 = arith.constant 0 : index
    %11 = vector.load %arg4[%c1, %c0_14] : memref<8x128xf32, #tpu.memory_space<vmem>>, vector<1x32xf32>
    %c2 = arith.constant 2 : index
    %c0_15 = arith.constant 0 : index
    %12 = vector.load %arg4[%c2, %c0_15] : memref<8x128xf32, #tpu.memory_space<vmem>>, vector<1x32xf32>
    %c3 = arith.constant 3 : index
    %c0_16 = arith.constant 0 : index
    %13 = vector.load %arg4[%c3, %c0_16] : memref<8x128xf32, #tpu.memory_space<vmem>>, vector<1x8xf32>
    %c4 = arith.constant 4 : index
    %c0_17 = arith.constant 0 : index
    %14 = vector.load %arg4[%c4, %c0_17] : memref<8x128xf32, #tpu.memory_space<vmem>>, vector<1x16xf32>
    %c5 = arith.constant 5 : index
    %c0_18 = arith.constant 0 : index
    %15 = vector.load %arg4[%c5, %c0_18] : memref<8x128xf32, #tpu.memory_space<vmem>>, vector<1x128xf32>
    %cst = arith.constant dense<0.000000e+00> : vector<64x8xf32>
    %16 = tpu.matmul %1, %3, %cst {dimension_numbers = #tpu.dot_dimension_numbers<[1], [0], [0], [1], [0, 0, 1, 1], [], []>} : vector<64x64xbf16>, vector<64x8xbf16>, vector<64x8xf32> -> vector<64x8xf32>
    %17 = arith.truncf %16 : vector<64x8xf32> to vector<64x8xbf16>
    %cst_19 = arith.constant dense<0.000000e+00> : vector<64x32xf32>
    %18 = tpu.matmul %17, %4, %cst_19 {dimension_numbers = #tpu.dot_dimension_numbers<[1], [0], [0], [1], [0, 0, 1, 1], [], []>} : vector<64x8xbf16>, vector<8x32xbf16>, vector<64x32xf32> -> vector<64x32xf32>
    %19 = vector.broadcast %10 : vector<1x32xf32> to vector<64x32xf32>
    %20 = arith.addf %18, %19 : vector<64x32xf32>
    %cst_20 = arith.constant 0.000000e+00 : f32
    %21 = vector.broadcast %cst_20 : f32 to vector<64x32xf32>
    %22 = arith.maximumf %20, %21 : vector<64x32xf32>
    %23 = arith.truncf %22 : vector<64x32xf32> to vector<64x32xbf16>
    %cst_21 = arith.constant dense<0.000000e+00> : vector<64x32xf32>
    %24 = tpu.matmul %1, %23, %cst_21 {dimension_numbers = #tpu.dot_dimension_numbers<[1], [0], [0], [1], [0, 0, 1, 1], [], []>} : vector<64x64xbf16>, vector<64x32xbf16>, vector<64x32xf32> -> vector<64x32xf32>
    %25 = arith.truncf %24 : vector<64x32xf32> to vector<64x32xbf16>
    %cst_22 = arith.constant dense<0.000000e+00> : vector<64x32xf32>
    %26 = tpu.matmul %25, %5, %cst_22 {dimension_numbers = #tpu.dot_dimension_numbers<[1], [0], [0], [1], [0, 0, 1, 1], [], []>} : vector<64x32xbf16>, vector<32x32xbf16>, vector<64x32xf32> -> vector<64x32xf32>
    %27 = vector.broadcast %11 : vector<1x32xf32> to vector<64x32xf32>
    %28 = arith.addf %26, %27 : vector<64x32xf32>
    %cst_23 = arith.constant 0.000000e+00 : f32
    %29 = vector.broadcast %cst_23 : f32 to vector<64x32xf32>
    %30 = arith.maximumf %28, %29 : vector<64x32xf32>
    %31 = arith.truncf %30 : vector<64x32xf32> to vector<64x32xbf16>
    %cst_24 = arith.constant dense<0.000000e+00> : vector<64x32xf32>
    %32 = tpu.matmul %1, %31, %cst_24 {dimension_numbers = #tpu.dot_dimension_numbers<[1], [0], [0], [1], [0, 0, 1, 1], [], []>} : vector<64x64xbf16>, vector<64x32xbf16>, vector<64x32xf32> -> vector<64x32xf32>
    %33 = arith.truncf %32 : vector<64x32xf32> to vector<64x32xbf16>
    %cst_25 = arith.constant dense<0.000000e+00> : vector<64x32xf32>
    %34 = tpu.matmul %33, %6, %cst_25 {dimension_numbers = #tpu.dot_dimension_numbers<[1], [0], [0], [1], [0, 0, 1, 1], [], []>} : vector<64x32xbf16>, vector<32x32xbf16>, vector<64x32xf32> -> vector<64x32xf32>
    %35 = vector.broadcast %12 : vector<1x32xf32> to vector<64x32xf32>
    %36 = arith.addf %34, %35 : vector<64x32xf32>
    %cst_26 = arith.constant 0.000000e+00 : f32
    %37 = vector.broadcast %cst_26 : f32 to vector<64x32xf32>
    %38 = arith.maximumf %36, %37 : vector<64x32xf32>
    %39 = arith.truncf %38 : vector<64x32xf32> to vector<64x32xbf16>
    %cst_27 = arith.constant dense<0.000000e+00> : vector<64x8xf32>
    %40 = tpu.matmul %39, %7, %cst_27 {dimension_numbers = #tpu.dot_dimension_numbers<[1], [0], [0], [1], [0, 0, 1, 1], [], []>} : vector<64x32xbf16>, vector<32x8xbf16>, vector<64x8xf32> -> vector<64x8xf32>
    %41 = vector.broadcast %13 : vector<1x8xf32> to vector<64x8xf32>
    %42 = arith.addf %40, %41 : vector<64x8xf32>
    %43 = arith.truncf %42 : vector<64x8xf32> to vector<64x8xbf16>
    %44 = vector.extract_strided_slice %43 {offsets = [0, 0], sizes = [16, 8], strides = [1, 1]} : vector<64x8xbf16> to vector<16x8xbf16>
    %cst_28 = arith.constant dense<0.000000e+00> : vector<8x16xf32>
    %45 = tpu.matmul %44, %8, %cst_28 {dimension_numbers = #tpu.dot_dimension_numbers<[0], [0], [1], [1], [0, 1, 1, 1], [], []>} : vector<16x8xbf16>, vector<16x16xbf16>, vector<8x16xf32> -> vector<8x16xf32>
    %46 = vector.broadcast %14 : vector<1x16xf32> to vector<8x16xf32>
    %47 = arith.addf %45, %46 : vector<8x16xf32>
    %cst_29 = arith.constant 0.000000e+00 : f32
    %48 = vector.broadcast %cst_29 : f32 to vector<8x16xf32>
    %49 = arith.maximumf %47, %48 : vector<8x16xf32>
    %50 = vector.extract_strided_slice %43 {offsets = [16, 0], sizes = [16, 8], strides = [1, 1]} : vector<64x8xbf16> to vector<16x8xbf16>
    %cst_30 = arith.constant dense<0.000000e+00> : vector<8x16xf32>
    %51 = tpu.matmul %50, %8, %cst_30 {dimension_numbers = #tpu.dot_dimension_numbers<[0], [0], [1], [1], [0, 1, 1, 1], [], []>} : vector<16x8xbf16>, vector<16x16xbf16>, vector<8x16xf32> -> vector<8x16xf32>
    %52 = vector.broadcast %14 : vector<1x16xf32> to vector<8x16xf32>
    %53 = arith.addf %51, %52 : vector<8x16xf32>
    %cst_31 = arith.constant 0.000000e+00 : f32
    %54 = vector.broadcast %cst_31 : f32 to vector<8x16xf32>
    %55 = arith.maximumf %53, %54 : vector<8x16xf32>
    %56 = vector.extract_strided_slice %43 {offsets = [32, 0], sizes = [16, 8], strides = [1, 1]} : vector<64x8xbf16> to vector<16x8xbf16>
    %cst_32 = arith.constant dense<0.000000e+00> : vector<8x16xf32>
    %57 = tpu.matmul %56, %8, %cst_32 {dimension_numbers = #tpu.dot_dimension_numbers<[0], [0], [1], [1], [0, 1, 1, 1], [], []>} : vector<16x8xbf16>, vector<16x16xbf16>, vector<8x16xf32> -> vector<8x16xf32>
    %58 = vector.broadcast %14 : vector<1x16xf32> to vector<8x16xf32>
    %59 = arith.addf %57, %58 : vector<8x16xf32>
    %cst_33 = arith.constant 0.000000e+00 : f32
    %60 = vector.broadcast %cst_33 : f32 to vector<8x16xf32>
    %61 = arith.maximumf %59, %60 : vector<8x16xf32>
    %62 = vector.extract_strided_slice %43 {offsets = [48, 0], sizes = [16, 8], strides = [1, 1]} : vector<64x8xbf16> to vector<16x8xbf16>
    %cst_34 = arith.constant dense<0.000000e+00> : vector<8x16xf32>
    %63 = tpu.matmul %62, %8, %cst_34 {dimension_numbers = #tpu.dot_dimension_numbers<[0], [0], [1], [1], [0, 1, 1, 1], [], []>} : vector<16x8xbf16>, vector<16x16xbf16>, vector<8x16xf32> -> vector<8x16xf32>
    %64 = vector.broadcast %14 : vector<1x16xf32> to vector<8x16xf32>
    %65 = arith.addf %63, %64 : vector<8x16xf32>
    %cst_35 = arith.constant 0.000000e+00 : f32
    %66 = vector.broadcast %cst_35 : f32 to vector<8x16xf32>
    %67 = arith.maximumf %65, %66 : vector<8x16xf32>
    %68 = tpu.concatenate %49, %55, %61, %67 in 0 : vector<8x16xf32>, vector<8x16xf32>, vector<8x16xf32>, vector<8x16xf32> -> vector<32x16xf32>
    %69 = arith.truncf %68 : vector<32x16xf32> to vector<32x16xbf16>
    %cst_36 = arith.constant dense<0.000000e+00> : vector<32x128xf32>
    %70 = tpu.matmul %69, %9, %cst_36 {dimension_numbers = #tpu.dot_dimension_numbers<[1], [0], [0], [1], [0, 0, 1, 1], [], []>} : vector<32x16xbf16>, vector<16x128xbf16>, vector<32x128xf32> -> vector<32x128xf32>
    %71 = vector.broadcast %15 : vector<1x128xf32> to vector<32x128xf32>
    %72 = arith.addf %70, %71 : vector<32x128xf32>
    %cst_37 = arith.constant dense<0xFF800000> : vector<32xf32>
    %73 = vector.multi_reduction <maximumf>, %72, %cst_37 [1] : vector<32x128xf32> to vector<32xf32>
    %74 = vector.shape_cast %73 : vector<32xf32> to vector<32x1xf32>
    %75 = vector.broadcast %74 : vector<32x1xf32> to vector<32x128xf32>
    %76 = arith.subf %72, %75 : vector<32x128xf32>
    %77 = math.exp %76 : vector<32x128xf32>
    %cst_38 = arith.constant dense<0.000000e+00> : vector<32xf32>
    %78 = vector.multi_reduction <add>, %77, %cst_38 [1] : vector<32x128xf32> to vector<32xf32>
    %79 = vector.shape_cast %78 : vector<32xf32> to vector<32x1xf32>
    %80 = math.log %79 : vector<32x1xf32>
    %81 = vector.broadcast %80 : vector<32x1xf32> to vector<32x128xf32>
    %82 = arith.subf %76, %81 : vector<32x128xf32>
    %c0_39 = arith.constant 0 : index
    %c0_40 = arith.constant 0 : index
    %c0_41 = arith.constant 0 : index
    %83 = vector.load %arg5[%c0_39, %c0_40, %c0_41] : memref<1x32x128xf32, #tpu.memory_space<vmem>>, vector<1x32x128xf32>
    %84 = vector.shape_cast %83 : vector<1x32x128xf32> to vector<32x128xf32>
    %85 = vector.shape_cast %82 : vector<32x128xf32> to vector<1x32x128xf32>
    tpu.vector_store %arg5[%c0_39, %c0_40, %c0_41], %85 {strides = array<i32>} : memref<1x32x128xf32, #tpu.memory_space<vmem>>, vector<1x32x128xf32>,
    return
  }
  func.func @transform_0(%arg0: i32) -> (i32, i32, i32) {
    %c0_i32 = arith.constant 0 : i32
    %c0_i32_0 = arith.constant 0 : i32
    %c0_i32_1 = arith.constant 0 : i32
    return %arg0, %c0_i32, %c0_i32_0 : i32, i32, i32
  }
  func.func @transform_1(%arg0: i32) -> (i32, i32, i32) {
    %c0_i32 = arith.constant 0 : i32
    %c0_i32_0 = arith.constant 0 : i32
    %c0_i32_1 = arith.constant 0 : i32
    return %arg0, %c0_i32, %c0_i32_0 : i32, i32, i32
  }
  func.func @transform_2(%arg0: i32) -> (i32, i32) {
    %c0_i32 = arith.constant 0 : i32
    %c0_i32_0 = arith.constant 0 : i32
    %c0_i32_1 = arith.constant 0 : i32
    return %c0_i32, %c0_i32_0 : i32, i32
  }
  func.func @transform_3(%arg0: i32) -> (i32, i32) {
    %c0_i32 = arith.constant 0 : i32
    %c0_i32_0 = arith.constant 0 : i32
    %c0_i32_1 = arith.constant 0 : i32
    return %c0_i32, %c0_i32_0 : i32, i32
  }
  func.func @transform_4(%arg0: i32) -> (i32, i32, i32) {
    %c0_i32 = arith.constant 0 : i32
    %c0_i32_0 = arith.constant 0 : i32
    %c0_i32_1 = arith.constant 0 : i32
    return %arg0, %c0_i32, %c0_i32_0 : i32, i32, i32
  }
}

</mosaic_0001>

<llo_original>
// kernel: feature_extractor_forward.1
$region0: #{feature_extractor_forward.1}
  #allocation0 [shape = 'u32[]', space=smem, size = 0x4, offset = 0x4, fixed_abs, tag = 'smem constant byte address 0x4 - core index']
  #allocation1 [shape = 'u32[72,128]{1,0:T(1,128)}', space=vmem, size = 0x9000, scoped, tag = 'internal scratch']
  %s0 = inlined_call_operand.vmem [shape: bf16[2,64,64], index: 0, kind: input, shape index: {}]
  %s1 = inlined_call_operand.vmem [shape: bf16[2,64,8], index: 1, kind: input, shape index: {}]
  %s2 = inlined_call_operand.vmem [shape: bf16[144,128], index: 2, kind: input, shape index: {}]
  %s3 = inlined_call_operand.vmem [shape: f32[8,128], index: 3, kind: input, shape index: {}]
  %s4 = inlined_call_operand.vmem [shape: f32[2,32,128], index: 4, kind: output, shape index: {}]
  %s5 = sld [smem:[#allocation0]]
  $region49: #{feature_extractor_forward.1} parent=0
    _
  %s7 = ssub.s32 1, %s5
  %s8 = scalar_select 0, %s7, %s5
  loop: start=0, step=1, limit=4
  $region2: #{feature_extractor_forward.1} parent=0 // loop_pre_header
    _
  $region3: #{feature_extractor_forward.1} parent=0 // loop_header
    %s10 = sphi 0, %s14
    %p11 = scmp.ge.s32.totalorder %s10, 4
    %s20 = sphi 0, %s22
    %s23 = sphi 0, %s20
    %s24 = sphi 0, %s23
    %s40 = sphi 0, %s24
    %s46 = sphi 0, %s48
    %s49 = sphi 0, %s46
    %s50 = sphi 0, %s49
    %s66 = sphi 0, %s50
    %s70 = sphi 0, %s70
    %s72 = sphi 0, %s70
    %s73 = sphi 0, %s72
    %s87 = sphi 0, %s73
    %s91 = sphi 0, %s91
    %s93 = sphi 0, %s91
    %s94 = sphi 0, %s93
    %s108 = sphi 0, %s94
    %s114 = sphi 0, %s116
    %s117 = sphi 0, %s114
    %s118 = sphi 0, %s117
    %s134 = sphi 0, %s118
  $region4: #{feature_extractor_forward.1} parent=0 // loop_header_branch
    %13 = sbr.rel (%p11) target = $region8
  $region5: #{feature_extractor_forward.1} parent=0 // loop_body
    %s15 = ssub.s32 %s10, 1
    %s16 = ssub.s32 %s10, 2
    %s17 = sadd.s32 %s10, 1
    %s18 = ssub.s32 %s10, %s17
    %p19 = scmp.eq.s32.totalorder %s18, 0
    %s21 = sadd.s32 %s20, 1
    %s22 = scalar_select %p19, %s20, %s21
    %p25 = pneg %p19
    %p26 = scmp.eq.s32.totalorder %s10, 1
    %p27 = por %p25, %p26
    %p28 = scmp.ne.s32.totalorder %s20, %s23
    %p29 = scmp.eq.s32.totalorder %s10, 0
    %p30 = por %p28, %p29
    %p31 = scmp.ne.s32.totalorder %s20, %s23
    %p32 = scmp.eq.s32.totalorder %s15, 1
    %p33 = por %p31, %p32
    %p34 = scmp.ne.s32.totalorder %s23, %s24
    %p35 = scmp.eq.s32.totalorder %s15, 0
    %p36 = por %p34, %p35
    %p37 = scmp.ne.s32.totalorder %s23, %s24
    %p38 = scmp.eq.s32.totalorder %s16, 1
    %p39 = por %p37, %p38
    %p41 = scmp.ne.s32.totalorder %s24, %s40
    %p42 = scmp.eq.s32.totalorder %s16, 0
    %p43 = por %p41, %p42
    %s44 = ssub.s32 %s10, %s17
    %p45 = scmp.eq.s32.totalorder %s44, 0
    %s47 = sadd.s32 %s46, 1
    %s48 = scalar_select %p45, %s46, %s47
    %p51 = pneg %p45
    %p52 = scmp.eq.s32.totalorder %s10, 1
    %p53 = por %p51, %p52
    %p54 = scmp.ne.s32.totalorder %s46, %s49
    %p55 = scmp.eq.s32.totalorder %s10, 0
    %p56 = por %p54, %p55
    %p57 = scmp.ne.s32.totalorder %s46, %s49
    %p58 = scmp.eq.s32.totalorder %s15, 1
    %p59 = por %p57, %p58
    %p60 = scmp.ne.s32.totalorder %s49, %s50
    %p61 = scmp.eq.s32.totalorder %s15, 0
    %p62 = por %p60, %p61
    %p63 = scmp.ne.s32.totalorder %s49, %s50
    %p64 = scmp.eq.s32.totalorder %s16, 1
    %p65 = por %p63, %p64
    %p67 = scmp.ne.s32.totalorder %s50, %s66
    %p68 = scmp.eq.s32.totalorder %s16, 0
    %p69 = por %p67, %p68
    %s71 = sadd.s32 %s70, 1
    %p74 = scmp.eq.s32.totalorder %s10, 1
    %p75 = scmp.ne.s32.totalorder %s70, %s72
    %p76 = scmp.eq.s32.totalorder %s10, 0
    %p77 = por %p75, %p76
    %p78 = scmp.ne.s32.totalorder %s70, %s72
    %p79 = scmp.eq.s32.totalorder %s15, 1
    %p80 = por %p78, %p79
    %p81 = scmp.ne.s32.totalorder %s72, %s73
    %p82 = scmp.eq.s32.totalorder %s15, 0
    %p83 = por %p81, %p82
    %p84 = scmp.ne.s32.totalorder %s72, %s73
    %p85 = scmp.eq.s32.totalorder %s16, 1
    %p86 = por %p84, %p85
    %p88 = scmp.ne.s32.totalorder %s73, %s87
    %p89 = scmp.eq.s32.totalorder %s16, 0
    %p90 = por %p88, %p89
    %s92 = sadd.s32 %s91, 1
    %p95 = scmp.eq.s32.totalorder %s10, 1
    %p96 = scmp.ne.s32.totalorder %s91, %s93
    %p97 = scmp.eq.s32.totalorder %s10, 0
    %p98 = por %p96, %p97
    %p99 = scmp.ne.s32.totalorder %s91, %s93
    %p100 = scmp.eq.s32.totalorder %s15, 1
    %p101 = por %p99, %p100
    %p102 = scmp.ne.s32.totalorder %s93, %s94
    %p103 = scmp.eq.s32.totalorder %s15, 0
    %p104 = por %p102, %p103
    %p105 = scmp.ne.s32.totalorder %s93, %s94
    %p106 = scmp.eq.s32.totalorder %s16, 1
    %p107 = por %p105, %p106
    %p109 = scmp.ne.s32.totalorder %s94, %s108
    %p110 = scmp.eq.s32.totalorder %s16, 0
    %p111 = por %p109, %p110
    %s112 = ssub.s32 %s10, %s17
    %p113 = scmp.eq.s32.totalorder %s112, 0
    %s115 = sadd.s32 %s114, 1
    %s116 = scalar_select %p113, %s114, %s115
    %p119 = pneg %p113
    %p120 = scmp.eq.s32.totalorder %s10, 1
    %p121 = por %p119, %p120
    %p122 = scmp.ne.s32.totalorder %s114, %s117
    %p123 = scmp.eq.s32.totalorder %s10, 0
    %p124 = por %p122, %p123
    %p125 = scmp.ne.s32.totalorder %s114, %s117
    %p126 = scmp.eq.s32.totalorder %s15, 1
    %p127 = por %p125, %p126
    %p128 = scmp.ne.s32.totalorder %s117, %s118
    %p129 = scmp.eq.s32.totalorder %s15, 0
    %p130 = por %p128, %p129
    %p131 = scmp.ne.s32.totalorder %s117, %s118
    %p132 = scmp.eq.s32.totalorder %s16, 1
    %p133 = por %p131, %p132
    %p135 = scmp.ne.s32.totalorder %s118, %s134
    %p136 = scmp.eq.s32.totalorder %s16, 0
    %p137 = por %p135, %p136
    %p138 = scmp.le.s32.totalorder 1, %s10
    %p139 = scmp.lt.s32.totalorder %s10, 3
    %p140 = pnand %p138, %p139
    %p141 = pneg %p140
    // Predicated region
    $region9: #{feature_extractor_forward.1} parent=5 // pred_check
      _
    $region10: #{feature_extractor_forward.1} parent=5 // pred_check_branch
      %143 = sbr.rel (%p140) target = $region12
    $region11: #{feature_extractor_forward.1} parent=5 // pred_region
      %s144 = ssub.s32 %s10, 1
      // Predicated region
      $region13: #{feature_extractor_forward.1} parent=11 // pred_check
        %p145 = pneg %p83
      $region14: #{feature_extractor_forward.1} parent=11 // pred_check_branch
        %147 = sbr.rel (%p145) target = $region16
      $region15: #{feature_extractor_forward.1} parent=11 // pred_region
        _
      $region16: #{feature_extractor_forward.1} parent=11 // pred_fallthru
        _
      // Predicated region
      $region17: #{feature_extractor_forward.1} parent=11 // pred_check
        %p148 = pneg %p104
      $region18: #{feature_extractor_forward.1} parent=11 // pred_check_branch
        %150 = sbr.rel (%p148) target = $region20
      $region19: #{feature_extractor_forward.1} parent=11 // pred_region
        _
      $region20: #{feature_extractor_forward.1} parent=11 // pred_fallthru
        _
    $region12: #{feature_extractor_forward.1} parent=5 // pred_fallthru
      _
    %p151 = scmp.lt.s32.totalorder %s10, 2
    // Predicated region
    $region21: #{feature_extractor_forward.1} parent=5 // pred_check
      %p152 = pneg %p151
    $region22: #{feature_extractor_forward.1} parent=5 // pred_check_branch
      %154 = sbr.rel (%p152) target = $region24
    $region23: #{feature_extractor_forward.1} parent=5 // pred_region
      // Predicated region
      $region25: #{feature_extractor_forward.1} parent=23 // pred_check
        %p155 = pneg %p30
      $region26: #{feature_extractor_forward.1} parent=23 // pred_check_branch
        %157 = sbr.rel (%p155) target = $region28
      $region27: #{feature_extractor_forward.1} parent=23 // pred_region
        %p158 = scmp.lt.s32.totalorder %s10, 1
        %s159 = scalar_select %p158, %s10, 1
        %s160 = smul.addr %s159, 8
        %s161 = smul.addr %s160, 4
        %s162 = scalar_lea.vmem %s0, %s161
      $region28: #{feature_extractor_forward.1} parent=23 // pred_fallthru
        _
      // Predicated region
      $region29: #{feature_extractor_forward.1} parent=23 // pred_check
        %p163 = pneg %p56
      $region30: #{feature_extractor_forward.1} parent=23 // pred_check_branch
        %165 = sbr.rel (%p163) target = $region32
      $region31: #{feature_extractor_forward.1} parent=23 // pred_region
        %p166 = scmp.lt.s32.totalorder %s10, 1
        %s167 = scalar_select %p166, %s10, 1
        %s168 = smul.addr %s167, 8
        %s169 = smul.addr %s168, 4
        %s170 = scalar_lea.vmem %s1, %s169
      $region32: #{feature_extractor_forward.1} parent=23 // pred_fallthru
        _
    $region24: #{feature_extractor_forward.1} parent=5 // pred_fallthru
      _
    %p171 = scmp.le.s32.totalorder 1, %s10
    %p172 = scmp.lt.s32.totalorder %s10, 3
    %p173 = pnand %p171, %p172
    %p174 = pneg %p173
    // Predicated region
    $region33: #{feature_extractor_forward.1} parent=5 // pred_check
      _
    $region34: #{feature_extractor_forward.1} parent=5 // pred_check_branch
      %176 = sbr.rel (%p173) target = $region36
    $region35: #{feature_extractor_forward.1} parent=5 // pred_region
      %s177 = ssub.s32 %s10, 1
      %p178 = scmp.lt.s32.totalorder %s15, 1
      %s179 = scalar_select %p178, %s15, 1
      %s180 = smul.addr %s179, 8
      %s181 = smul.addr %s180, 4
      %s182 = scalar_lea.vmem %s0, %s181
      %p183 = pneg %p36
      %p184 = pneg %p33
      %p185 = scmp.lt.s32.totalorder %s15, 1
      %s186 = scalar_select %p185, %s15, 1
      %s187 = smul.addr %s186, 8
      %s188 = smul.addr %s187, 4
      %s189 = scalar_lea.vmem %s1, %s188
      %p190 = pneg %p62
      %p191 = pneg %p59
      %p192 = pneg %p83
      %p193 = pneg %p80
      %p194 = pneg %p104
      %p195 = pneg %p101
      %p196 = pneg %p130
      %p197 = pneg %p127
      %p198 = scmp.lt.s32.totalorder %s15, 1
      %s199 = scalar_select %p198, %s15, 1
      %s200 = smul.addr %s199, 4
      %s201 = smul.addr %s200, 8
      %s202 = scalar_lea.vmem %s4, %s201
      %p203 = scmp.lt.s32.totalorder %s15, 1
      %s204 = scalar_select %p203, %s15, 1
      %s205 = smul.addr %s204, 8
      %s206 = smul.addr %s205, 4
      %s207 = scalar_lea.vmem %s0, %s206
      %p208 = scmp.lt.s32.totalorder %s15, 1
      %s209 = scalar_select %p208, %s15, 1
      %s210 = smul.addr %s209, 8
      %s211 = smul.addr %s210, 4
      %s212 = scalar_lea.vmem %s1, %s211
      %p213 = scmp.lt.s32.totalorder %s15, 1
      %s214 = scalar_select %p213, %s15, 1
      %s215 = smul.addr %s214, 4
      %s216 = smul.addr %s215, 8
      %s217 = scalar_lea.vmem %s4, %s216
      %v219 = vld [vmem:[%s207] sm:$0xf]
      %v220 = vld [vmem:[%s207 + $0x4] sm:$0xf]
      %v221 = vld [vmem:[%s207 + $0x8] sm:$0xf]
      %v222 = vld [vmem:[%s207 + $0xc] sm:$0xf]
      %v223 = vld [vmem:[%s207 + $0x10] sm:$0xf]
      %v224 = vld [vmem:[%s207 + $0x14] sm:$0xf]
      %v225 = vld [vmem:[%s207 + $0x18] sm:$0xf]
      %v226 = vld [vmem:[%s207 + $0x1c] sm:$0xf]
      %v227 = vld [vmem:[%s212] sm:$0xf]
      %v228 = vld [vmem:[%s212 + $0x4] sm:$0xf]
      %v229 = vld [vmem:[%s212 + $0x8] sm:$0xf]
      %v230 = vld [vmem:[%s212 + $0xc] sm:$0xf]
      %v231 = vld [vmem:[%s212 + $0x10] sm:$0xf]
      %v232 = vld [vmem:[%s212 + $0x14] sm:$0xf]
      %v233 = vld [vmem:[%s212 + $0x18] sm:$0xf]
      %v234 = vld [vmem:[%s212 + $0x1c] sm:$0xf]
      %v235 = vld [vmem:[%s2] sm:$0xf]
      %v236 = vld [vmem:[%s2 + $0x8] sm:$0xf]
      %v237 = vld [vmem:[%s2 + $0xc] sm:$0xf]
      %v238 = vld [vmem:[%s2 + $0x10] sm:$0xf]
      %v239 = vld [vmem:[%s2 + $0x14] sm:$0xf]
      %v240 = vld [vmem:[%s2 + $0x18] sm:$0xf]
      %v241 = vld [vmem:[%s2 + $0x1c] sm:$0xf]
      %v242 = vld [vmem:[%s2 + $0x20] sm:$0xf]
      %v243 = vld [vmem:[%s2 + $0x24] sm:$0xf]
      %v244 = vld [vmem:[%s2 + $0x28] sm:$0xf]
      %v245 = vld [vmem:[%s2 + $0x2c] sm:$0xf]
      %v246 = vld [vmem:[%s2 + $0x30] sm:$0xf]
      %v247 = vld [vmem:[%s2 + $0x34] sm:$0xf]
      %v248 = vld [vmem:[%s2 + $0x38] sm:$0xf]
      %v249 = vld [vmem:[%s2 + $0x3c] sm:$0xf]
      %v250 = vld [vmem:[%s2 + $0x40] sm:$0xf]
      %v251 = vld [vmem:[%s2 + $0x44] sm:$0xf]
      %v252 = vld [vmem:[%s3] sm:$0x1]
      %v253 = vld [vmem:[%s3 + $0x1] sm:$0x1]
      %v254 = vld [vmem:[%s3 + $0x2] sm:$0x1]
      %v255 = vld [vmem:[%s3 + $0x3] sm:$0x1]
      %v256 = vld [vmem:[%s3 + $0x4] sm:$0x1]
      %v257 = vld [vmem:[%s3 + $0x5] sm:$0x1]
      %v266 = vunpack.c.l.b16 %v219
      %v267 = vunpack.c.l.b16 %v220
      %v268 = vunpack.c.l.b16 %v221
      %v269 = vunpack.c.l.b16 %v222
      %v270 = vunpack.c.l.b16 %v223
      %v271 = vunpack.c.l.b16 %v224
      %v272 = vunpack.c.l.b16 %v225
      %v273 = vunpack.c.l.b16 %v226
      %v274 = vpack.c.b16 %v267, %v266
      %v275 = vpack.c.b16 %v269, %v268
      %v276 = vpack.c.b16 %v271, %v270
      %v277 = vpack.c.b16 %v273, %v272
      %v286 = vunpack.c.l.b16 %v227
      %v287 = vunpack.c.l.b16 %v228
      %v288 = vunpack.c.l.b16 %v229
      %v289 = vunpack.c.l.b16 %v230
      %v290 = vunpack.c.l.b16 %v231
      %v291 = vunpack.c.l.b16 %v232
      %v292 = vunpack.c.l.b16 %v233
      %v293 = vunpack.c.l.b16 %v234
      %v294 = vpack.c.b16 %v287, %v286
      %v295 = vpack.c.b16 %v289, %v288
      %v296 = vpack.c.b16 %v291, %v290
      %v297 = vpack.c.b16 %v293, %v292
      %vm302 = vcmask 523264
      %v304 = vsel %vm302, %v274, 0
      %v307 = vsel %vm302, %v275, 0
      %v310 = vsel %vm302, %v276, 0
      %v313 = vsel %vm302, %v277, 0
      %315 = vmatpush.bf16.msra.mxu0 0
      %316 = vmatpush.bf16.msra.mxu0 0
      %317 = vmatpush.bf16.msra.mxu0 0
      %318 = vmatpush.bf16.msra.mxu0 0
      %319 = vmatpush.bf16.msra.mxu0 %v297
      %320 = vmatpush.bf16.msra.mxu0 %v296
      %321 = vmatpush.bf16.msra.mxu0 %v295
      %322 = vmatpush.bf16.msra.mxu0 %v294
      %323 = vmatmul.bf16.gmra.mxu0 %v304
      %v324 = vpop.f32.mrf.mxu0
      %v325 = vadd.f32 0.0, %v324
      %v326 = vpop.f32.mrf.mxu0
      %v327 = vadd.f32 0.0, %v326
      %328 = vmatmul.bf16.gmra.mxu0 %v307
      %v329 = vpop.f32.mrf.mxu0
      %v330 = vadd.f32 0.0, %v329
      %v331 = vpop.f32.mrf.mxu0
      %v332 = vadd.f32 0.0, %v331
      %333 = vmatmul.bf16.gmra.mxu0 %v310
      %v334 = vpop.f32.mrf.mxu0
      %v335 = vadd.f32 0.0, %v334
      %v336 = vpop.f32.mrf.mxu0
      %v337 = vadd.f32 0.0, %v336
      %338 = vmatmul.bf16.gmra.mxu0 %v313
      %v339 = vpop.f32.mrf.mxu0
      %v340 = vadd.f32 0.0, %v339
      %v341 = vpop.f32.mrf.mxu0
      %v342 = vadd.f32 0.0, %v341
      %343 = vdwg.mxu0
      %v344 = vpack.c.bf16 %v327, %v325
      %v345 = vpack.c.bf16 %v332, %v330
      %v346 = vpack.c.bf16 %v337, %v335
      %v347 = vpack.c.bf16 %v342, %v340
      %v348 = vperm.slane %v252, 0
      %vm349 = vcmask 64512
      %v351 = vsel %vm349, %v344, 0
      %v354 = vsel %vm349, %v345, 0
      %v357 = vsel %vm349, %v346, 0
      %v360 = vsel %vm349, %v347, 0
      %vm362 = vcmask 1043456
      %v364 = vsel %vm362, %v235, 0
      %366 = vmatpush.bf16.msra.mxu0 0
      %367 = vmatpush.bf16.msra.mxu0 0
      %368 = vmatpush.bf16.msra.mxu0 0
      %369 = vmatpush.bf16.msra.mxu0 0
      %370 = vmatpush.bf16.msra.mxu0 0
      %371 = vmatpush.bf16.msra.mxu0 0
      %372 = vmatpush.bf16.msra.mxu0 0
      %373 = vmatpush.bf16.msra.mxu0 %v364
      %374 = vmatmul.bf16.gmra.mxu0 %v351
      %v375 = vpop.f32.mrf.mxu0
      %v376 = vadd.f32 %v348, %v375
      %v377 = vpop.f32.mrf.mxu0
      %v378 = vadd.f32 %v348, %v377
      %379 = vmatmul.bf16.gmra.mxu0 %v354
      %v380 = vpop.f32.mrf.mxu0
      %v381 = vadd.f32 %v348, %v380
      %v382 = vpop.f32.mrf.mxu0
      %v383 = vadd.f32 %v348, %v382
      %384 = vmatmul.bf16.gmra.mxu0 %v357
      %v385 = vpop.f32.mrf.mxu0
      %v386 = vadd.f32 %v348, %v385
      %v387 = vpop.f32.mrf.mxu0
      %v388 = vadd.f32 %v348, %v387
      %389 = vmatmul.bf16.gmra.mxu0 %v360
      %v390 = vpop.f32.mrf.mxu0
      %v391 = vadd.f32 %v348, %v390
      %v392 = vpop.f32.mrf.mxu0
      %v393 = vadd.f32 %v348, %v392
      %394 = vdwg.mxu0
      %v395 = vmax.f32 %v376, 0.0
      %v396 = vmax.f32 %v378, 0.0
      %v397 = vmax.f32 %v381, 0.0
      %v398 = vmax.f32 %v383, 0.0
      %v399 = vmax.f32 %v386, 0.0
      %v400 = vmax.f32 %v388, 0.0
      %v401 = vmax.f32 %v391, 0.0
      %v402 = vmax.f32 %v393, 0.0
      %v403 = vpack.c.bf16 %v396, %v395
      %v404 = vpack.c.bf16 %v398, %v397
      %v405 = vpack.c.bf16 %v400, %v399
      %v406 = vpack.c.bf16 %v402, %v401
      %407 = vmatpush.bf16.msra.mxu0 0
      %408 = vmatpush.bf16.msra.mxu0 0
      %409 = vmatpush.bf16.msra.mxu0 0
      %410 = vmatpush.bf16.msra.mxu0 0
      %411 = vmatpush.bf16.msra.mxu0 %v406
      %412 = vmatpush.bf16.msra.mxu0 %v405
      %413 = vmatpush.bf16.msra.mxu0 %v404
      %414 = vmatpush.bf16.msra.mxu0 %v403
      %415 = vmatmul.bf16.gmra.mxu0 %v304
      %v416 = vpop.f32.mrf.mxu0
      %v417 = vadd.f32 0.0, %v416
      %v418 = vpop.f32.mrf.mxu0
      %v419 = vadd.f32 0.0, %v418
      %420 = vmatmul.bf16.gmra.mxu0 %v307
      %v421 = vpop.f32.mrf.mxu0
      %v422 = vadd.f32 0.0, %v421
      %v423 = vpop.f32.mrf.mxu0
      %v424 = vadd.f32 0.0, %v423
      %425 = vmatmul.bf16.gmra.mxu0 %v310
      %v426 = vpop.f32.mrf.mxu0
      %v427 = vadd.f32 0.0, %v426
      %v428 = vpop.f32.mrf.mxu0
      %v429 = vadd.f32 0.0, %v428
      %430 = vmatmul.bf16.gmra.mxu0 %v313
      %v431 = vpop.f32.mrf.mxu0
      %v432 = vadd.f32 0.0, %v431
      %v433 = vpop.f32.mrf.mxu0
      %v434 = vadd.f32 0.0, %v433
      %435 = vdwg.mxu0
      %v436 = vpack.c.bf16 %v419, %v417
      %v437 = vpack.c.bf16 %v424, %v422
      %v438 = vpack.c.bf16 %v429, %v427
      %v439 = vpack.c.bf16 %v434, %v432
      %v440 = vperm.slane %v253, 0
      %v445 = vunpack.c.l.b16 %v236
      %v446 = vunpack.c.l.b16 %v237
      %v447 = vunpack.c.l.b16 %v238
      %v448 = vunpack.c.l.b16 %v239
      %v449 = vpack.c.b16 %v446, %v445
      %v450 = vpack.c.b16 %v448, %v447
      %vm453 = vcmask 261120
      %v455 = vsel %vm453, %v436, 0
      %v458 = vsel %vm453, %v437, 0
      %v461 = vsel %vm453, %v438, 0
      %v464 = vsel %vm453, %v439, 0
      %466 = vmatpush.bf16.msra.mxu0 0
      %467 = vmatpush.bf16.msra.mxu0 0
      %468 = vmatpush.bf16.msra.mxu0 0
      %469 = vmatpush.bf16.msra.mxu0 0
      %470 = vmatpush.bf16.msra.mxu0 0
      %471 = vmatpush.bf16.msra.mxu0 0
      %472 = vmatpush.bf16.msra.mxu0 %v450
      %473 = vmatpush.bf16.msra.mxu0 %v449
      %474 = vmatmul.bf16.gmra.mxu0 %v455
      %v475 = vpop.f32.mrf.mxu0
      %v476 = vadd.f32 %v440, %v475
      %v477 = vpop.f32.mrf.mxu0
      %v478 = vadd.f32 %v440, %v477
      %479 = vmatmul.bf16.gmra.mxu0 %v458
      %v480 = vpop.f32.mrf.mxu0
      %v481 = vadd.f32 %v440, %v480
      %v482 = vpop.f32.mrf.mxu0
      %v483 = vadd.f32 %v440, %v482
      %484 = vmatmul.bf16.gmra.mxu0 %v461
      %v485 = vpop.f32.mrf.mxu0
      %v486 = vadd.f32 %v440, %v485
      %v487 = vpop.f32.mrf.mxu0
      %v488 = vadd.f32 %v440, %v487
      %489 = vmatmul.bf16.gmra.mxu0 %v464
      %v490 = vpop.f32.mrf.mxu0
      %v491 = vadd.f32 %v440, %v490
      %v492 = vpop.f32.mrf.mxu0
      %v493 = vadd.f32 %v440, %v492
      %494 = vdwg.mxu0
      %v495 = vmax.f32 %v476, 0.0
      %v496 = vmax.f32 %v478, 0.0
      %v497 = vmax.f32 %v481, 0.0
      %v498 = vmax.f32 %v483, 0.0
      %v499 = vmax.f32 %v486, 0.0
      %v500 = vmax.f32 %v488, 0.0
      %v501 = vmax.f32 %v491, 0.0
      %v502 = vmax.f32 %v493, 0.0
      %v503 = vpack.c.bf16 %v496, %v495
      %v504 = vpack.c.bf16 %v498, %v497
      %v505 = vpack.c.bf16 %v500, %v499
      %v506 = vpack.c.bf16 %v502, %v501
      %507 = vmatpush.bf16.msra.mxu0 0
      %508 = vmatpush.bf16.msra.mxu0 0
      %509 = vmatpush.bf16.msra.mxu0 0
      %510 = vmatpush.bf16.msra.mxu0 0
      %511 = vmatpush.bf16.msra.mxu0 %v506
      %512 = vmatpush.bf16.msra.mxu0 %v505
      %513 = vmatpush.bf16.msra.mxu0 %v504
      %514 = vmatpush.bf16.msra.mxu0 %v503
      %515 = vmatmul.bf16.gmra.mxu0 %v304
      %v516 = vpop.f32.mrf.mxu0
      %v517 = vadd.f32 0.0, %v516
      %v518 = vpop.f32.mrf.mxu0
      %v519 = vadd.f32 0.0, %v518
      %520 = vmatmul.bf16.gmra.mxu0 %v307
      %v521 = vpop.f32.mrf.mxu0
      %v522 = vadd.f32 0.0, %v521
      %v523 = vpop.f32.mrf.mxu0
      %v524 = vadd.f32 0.0, %v523
      %525 = vmatmul.bf16.gmra.mxu0 %v310
      %v526 = vpop.f32.mrf.mxu0
      %v527 = vadd.f32 0.0, %v526
      %v528 = vpop.f32.mrf.mxu0
      %v529 = vadd.f32 0.0, %v528
      %530 = vmatmul.bf16.gmra.mxu0 %v313
      %v531 = vpop.f32.mrf.mxu0
      %v532 = vadd.f32 0.0, %v531
      %v533 = vpop.f32.mrf.mxu0
      %v534 = vadd.f32 0.0, %v533
      %535 = vdwg.mxu0
      %v536 = vpack.c.bf16 %v519, %v517
      %v537 = vpack.c.bf16 %v524, %v522
      %v538 = vpack.c.bf16 %v529, %v527
      %v539 = vpack.c.bf16 %v534, %v532
      %v540 = vperm.slane %v254, 0
      %v545 = vunpack.c.l.b16 %v240
      %v546 = vunpack.c.l.b16 %v241
      %v547 = vunpack.c.l.b16 %v242
      %v548 = vunpack.c.l.b16 %v243
      %v549 = vpack.c.b16 %v546, %v545
      %v550 = vpack.c.b16 %v548, %v547
      %v554 = vsel %vm453, %v536, 0
      %v557 = vsel %vm453, %v537, 0
      %v560 = vsel %vm453, %v538, 0
      %v563 = vsel %vm453, %v539, 0
      %565 = vmatpush.bf16.msra.mxu0 0
      %566 = vmatpush.bf16.msra.mxu0 0
      %567 = vmatpush.bf16.msra.mxu0 0
      %568 = vmatpush.bf16.msra.mxu0 0
      %569 = vmatpush.bf16.msra.mxu0 0
      %570 = vmatpush.bf16.msra.mxu0 0
      %571 = vmatpush.bf16.msra.mxu0 %v550
      %572 = vmatpush.bf16.msra.mxu0 %v549
      %573 = vmatmul.bf16.gmra.mxu0 %v554
      %v574 = vpop.f32.mrf.mxu0
      %v575 = vadd.f32 %v540, %v574
      %v576 = vpop.f32.mrf.mxu0
      %v577 = vadd.f32 %v540, %v576
      %578 = vmatmul.bf16.gmra.mxu0 %v557
      %v579 = vpop.f32.mrf.mxu0
      %v580 = vadd.f32 %v540, %v579
      %v581 = vpop.f32.mrf.mxu0
      %v582 = vadd.f32 %v540, %v581
      %583 = vmatmul.bf16.gmra.mxu0 %v560
      %v584 = vpop.f32.mrf.mxu0
      %v585 = vadd.f32 %v540, %v584
      %v586 = vpop.f32.mrf.mxu0
      %v587 = vadd.f32 %v540, %v586
      %588 = vmatmul.bf16.gmra.mxu0 %v563
      %v589 = vpop.f32.mrf.mxu0
      %v590 = vadd.f32 %v540, %v589
      %v591 = vpop.f32.mrf.mxu0
      %v592 = vadd.f32 %v540, %v591
      %593 = vdwg.mxu0
      %v594 = vmax.f32 %v575, 0.0
      %v595 = vmax.f32 %v577, 0.0
      %v596 = vmax.f32 %v580, 0.0
      %v597 = vmax.f32 %v582, 0.0
      %v598 = vmax.f32 %v585, 0.0
      %v599 = vmax.f32 %v587, 0.0
      %v600 = vmax.f32 %v590, 0.0
      %v601 = vmax.f32 %v592, 0.0
      %v602 = vpack.c.bf16 %v595, %v594
      %v603 = vpack.c.bf16 %v597, %v596
      %v604 = vpack.c.bf16 %v599, %v598
      %v605 = vpack.c.bf16 %v601, %v600
      %v606 = vperm.slane %v255, 0
      %v611 = vunpack.c.l.b16 %v244
      %v612 = vunpack.c.l.b16 %v245
      %v613 = vunpack.c.l.b16 %v246
      %v614 = vunpack.c.l.b16 %v247
      %v615 = vpack.c.b16 %v612, %v611
      %v616 = vpack.c.b16 %v614, %v613
      %v620 = vsel %vm453, %v602, 0
      %v623 = vsel %vm453, %v603, 0
      %v626 = vsel %vm453, %v604, 0
      %v629 = vsel %vm453, %v605, 0
      %631 = vmatpush.bf16.msra.mxu0 0
      %632 = vmatpush.bf16.msra.mxu0 0
      %633 = vmatpush.bf16.msra.mxu0 0
      %634 = vmatpush.bf16.msra.mxu0 0
      %635 = vmatpush.bf16.msra.mxu0 0
      %636 = vmatpush.bf16.msra.mxu0 0
      %637 = vmatpush.bf16.msra.mxu0 %v616
      %638 = vmatpush.bf16.msra.mxu0 %v615
      %639 = vmatmul.bf16.gmra.mxu0 %v620
      %v640 = vpop.f32.mrf.mxu0
      %v641 = vadd.f32 %v606, %v640
      %v642 = vpop.f32.mrf.mxu0
      %v643 = vadd.f32 %v606, %v642
      %644 = vmatmul.bf16.gmra.mxu0 %v623
      %v645 = vpop.f32.mrf.mxu0
      %v646 = vadd.f32 %v606, %v645
      %v647 = vpop.f32.mrf.mxu0
      %v648 = vadd.f32 %v606, %v647
      %649 = vmatmul.bf16.gmra.mxu0 %v626
      %v650 = vpop.f32.mrf.mxu0
      %v651 = vadd.f32 %v606, %v650
      %v652 = vpop.f32.mrf.mxu0
      %v653 = vadd.f32 %v606, %v652
      %654 = vmatmul.bf16.gmra.mxu0 %v629
      %v655 = vpop.f32.mrf.mxu0
      %v656 = vadd.f32 %v606, %v655
      %v657 = vpop.f32.mrf.mxu0
      %v658 = vadd.f32 %v606, %v657
      %659 = vdwg.mxu0
      %v660 = vpack.c.bf16 %v641, %v641
      %v661 = vpack.c.bf16 %v643, %v643
      %v662 = vpack.c.bf16 %v646, %v646
      %v663 = vpack.c.bf16 %v648, %v648
      %v664 = vpack.c.bf16 %v651, %v651
      %v665 = vpack.c.bf16 %v653, %v653
      %v666 = vpack.c.bf16 %v656, %v656
      %v667 = vpack.c.bf16 %v658, %v658
      %v668 = vperm.slane %v256, 0
      %v671 = vunpack.c.l.b16 %v660
      %v672 = vunpack.c.l.b16 %v661
      %v673 = vpack.c.b16 %v672, %v671
      %675 = vxpose.xlu0.c.b16.start [1/8] %v673, 128
      %676 = vxpose.xlu0.c.b16.cont [2/8] 0, 128
      %677 = vxpose.xlu0.c.b16.cont [3/8] 0, 128
      %678 = vxpose.xlu0.c.b16.cont [4/8] 0, 128
      %679 = vxpose.xlu0.c.b16.cont [5/8] 0, 128
      %680 = vxpose.xlu0.c.b16.cont [6/8] 0, 128
      %681 = vxpose.xlu0.c.b16.cont [7/8] 0, 128
      %682 = vxpose.xlu0.c.b16.end [8/8] 0, 128
      %v683 = vpop.trf.xlu0
      %v684 = vpop.trf.xlu0
      %v685 = vpop.trf.xlu0
      %v686 = vpop.trf.xlu0
      %v687 = vpop.trf.xlu0
      %v688 = vpop.trf.xlu0
      %v689 = vpop.trf.xlu0
      %v690 = vpop.trf.xlu0
      %v693 = vunpack.c.l.b16 %v248
      %v694 = vunpack.c.l.b16 %v249
      %v695 = vpack.c.b16 %v694, %v693
      %vm697 = vcmask 130048
      %v699 = vsel %vm697, %v683, 0
      %701 = vmatpush.bf16.msra.mxu0 0
      %702 = vmatpush.bf16.msra.mxu0 0
      %703 = vmatpush.bf16.msra.mxu0 0
      %704 = vmatpush.bf16.msra.mxu0 0
      %705 = vmatpush.bf16.msra.mxu0 0
      %706 = vmatpush.bf16.msra.mxu0 0
      %707 = vmatpush.bf16.msra.mxu0 0
      %708 = vmatpush.bf16.msra.mxu0 %v695
      %709 = vmatmul.bf16.gmra.mxu0 %v699
      %v710 = vpop.f32.mrf.mxu0
      %v711 = vadd.f32 %v668, %v710
      %v712 = vpop.f32.mrf.mxu0
      %713 = vdwg.mxu0
      %v714 = vmax.f32 %v711, 0.0
      %v717 = vunpack.c.l.b16 %v662
      %v718 = vunpack.c.l.b16 %v663
      %v719 = vpack.c.b16 %v718, %v717
      %721 = vxpose.xlu0.c.b16.start [1/8] %v719, 128
      %722 = vxpose.xlu0.c.b16.cont [2/8] 0, 128
      %723 = vxpose.xlu0.c.b16.cont [3/8] 0, 128
      %724 = vxpose.xlu0.c.b16.cont [4/8] 0, 128
      %725 = vxpose.xlu0.c.b16.cont [5/8] 0, 128
      %726 = vxpose.xlu0.c.b16.cont [6/8] 0, 128
      %727 = vxpose.xlu0.c.b16.cont [7/8] 0, 128
      %728 = vxpose.xlu0.c.b16.end [8/8] 0, 128
      %v729 = vpop.trf.xlu0
      %v730 = vpop.trf.xlu0
      %v731 = vpop.trf.xlu0
      %v732 = vpop.trf.xlu0
      %v733 = vpop.trf.xlu0
      %v734 = vpop.trf.xlu0
      %v735 = vpop.trf.xlu0
      %v736 = vpop.trf.xlu0
      %v738 = vsel %vm697, %v729, 0
      %740 = vmatpush.bf16.msra.mxu0 0
      %741 = vmatpush.bf16.msra.mxu0 0
      %742 = vmatpush.bf16.msra.mxu0 0
      %743 = vmatpush.bf16.msra.mxu0 0
      %744 = vmatpush.bf16.msra.mxu0 0
      %745 = vmatpush.bf16.msra.mxu0 0
      %746 = vmatpush.bf16.msra.mxu0 0
      %747 = vmatpush.bf16.msra.mxu0 %v695
      %748 = vmatmul.bf16.gmra.mxu0 %v738
      %v749 = vpop.f32.mrf.mxu0
      %v750 = vadd.f32 %v668, %v749
      %v751 = vpop.f32.mrf.mxu0
      %752 = vdwg.mxu0
      %v753 = vmax.f32 %v750, 0.0
      %v756 = vunpack.c.l.b16 %v664
      %v757 = vunpack.c.l.b16 %v665
      %v758 = vpack.c.b16 %v757, %v756
      %760 = vxpose.xlu0.c.b16.start [1/8] %v758, 128
      %761 = vxpose.xlu0.c.b16.cont [2/8] 0, 128
      %762 = vxpose.xlu0.c.b16.cont [3/8] 0, 128
      %763 = vxpose.xlu0.c.b16.cont [4/8] 0, 128
      %764 = vxpose.xlu0.c.b16.cont [5/8] 0, 128
      %765 = vxpose.xlu0.c.b16.cont [6/8] 0, 128
      %766 = vxpose.xlu0.c.b16.cont [7/8] 0, 128
      %767 = vxpose.xlu0.c.b16.end [8/8] 0, 128
      %v768 = vpop.trf.xlu0
      %v769 = vpop.trf.xlu0
      %v770 = vpop.trf.xlu0
      %v771 = vpop.trf.xlu0
      %v772 = vpop.trf.xlu0
      %v773 = vpop.trf.xlu0
      %v774 = vpop.trf.xlu0
      %v775 = vpop.trf.xlu0
      %v777 = vsel %vm697, %v768, 0
      %779 = vmatpush.bf16.msra.mxu0 0
      %780 = vmatpush.bf16.msra.mxu0 0
      %781 = vmatpush.bf16.msra.mxu0 0
      %782 = vmatpush.bf16.msra.mxu0 0
      %783 = vmatpush.bf16.msra.mxu0 0
      %784 = vmatpush.bf16.msra.mxu0 0
      %785 = vmatpush.bf16.msra.mxu0 0
      %786 = vmatpush.bf16.msra.mxu0 %v695
      %787 = vmatmul.bf16.gmra.mxu0 %v777
      %v788 = vpop.f32.mrf.mxu0
      %v789 = vadd.f32 %v668, %v788
      %v790 = vpop.f32.mrf.mxu0
      %791 = vdwg.mxu0
      %v792 = vmax.f32 %v789, 0.0
      %v795 = vunpack.c.l.b16 %v666
      %v796 = vunpack.c.l.b16 %v667
      %v797 = vpack.c.b16 %v796, %v795
      %799 = vxpose.xlu0.c.b16.start [1/8] %v797, 128
      %800 = vxpose.xlu0.c.b16.cont [2/8] 0, 128
      %801 = vxpose.xlu0.c.b16.cont [3/8] 0, 128
      %802 = vxpose.xlu0.c.b16.cont [4/8] 0, 128
      %803 = vxpose.xlu0.c.b16.cont [5/8] 0, 128
      %804 = vxpose.xlu0.c.b16.cont [6/8] 0, 128
      %805 = vxpose.xlu0.c.b16.cont [7/8] 0, 128
      %806 = vxpose.xlu0.c.b16.end [8/8] 0, 128
      %v807 = vpop.trf.xlu0
      %v808 = vpop.trf.xlu0
      %v809 = vpop.trf.xlu0
      %v810 = vpop.trf.xlu0
      %v811 = vpop.trf.xlu0
      %v812 = vpop.trf.xlu0
      %v813 = vpop.trf.xlu0
      %v814 = vpop.trf.xlu0
      %v816 = vsel %vm697, %v807, 0
      %818 = vmatpush.bf16.msra.mxu0 0
      %819 = vmatpush.bf16.msra.mxu0 0
      %820 = vmatpush.bf16.msra.mxu0 0
      %821 = vmatpush.bf16.msra.mxu0 0
      %822 = vmatpush.bf16.msra.mxu0 0
      %823 = vmatpush.bf16.msra.mxu0 0
      %824 = vmatpush.bf16.msra.mxu0 0
      %825 = vmatpush.bf16.msra.mxu0 %v695
      %826 = vmatmul.bf16.gmra.mxu0 %v816
      %v827 = vpop.f32.mrf.mxu0
      %v828 = vadd.f32 %v668, %v827
      %v829 = vpop.f32.mrf.mxu0
      %830 = vdwg.mxu0
      %v831 = vmax.f32 %v828, 0.0
      %v832 = vpack.c.bf16 %v753, %v714
      %v833 = vpack.c.bf16 %v831, %v792
      %v834 = vperm.slane %v257, 0
      %v837 = vunpack.c.l.b16 %v250
      %v838 = vunpack.c.l.b16 %v251
      %v839 = vpack.c.b16 %v838, %v837
      %v842 = vsel %vm697, %v832, 0
      %v845 = vsel %vm697, %v833, 0
      %847 = vmatpush.bf16.msra.mxu0 0
      %848 = vmatpush.bf16.msra.mxu0 0
      %849 = vmatpush.bf16.msra.mxu0 0
      %850 = vmatpush.bf16.msra.mxu0 0
      %851 = vmatpush.bf16.msra.mxu0 0
      %852 = vmatpush.bf16.msra.mxu0 0
      %853 = vmatpush.bf16.msra.mxu0 0
      %854 = vmatpush.bf16.msra.mxu0 %v839
      %855 = vmatmul.bf16.gmra.mxu0 %v842
      %v856 = vpop.f32.mrf.mxu0
      %v857 = vadd.f32 %v834, %v856
      %v858 = vpop.f32.mrf.mxu0
      %v859 = vadd.f32 %v834, %v858
      %860 = vmatmul.bf16.gmra.mxu0 %v845
      %v861 = vpop.f32.mrf.mxu0
      %v862 = vadd.f32 %v834, %v861
      %v863 = vpop.f32.mrf.mxu0
      %v864 = vadd.f32 %v834, %v863
      %865 = vdwg.mxu0
      %866 = vmax.xlane.f32.xlu0 %v857
      %v867 = vpop.xlane.xlu0 %866
      %868 = vmax.xlane.f32.xlu0 %v859
      %v869 = vpop.xlane.xlu0 %868
      %870 = vmax.xlane.f32.xlu0 %v862
      %v871 = vpop.xlane.xlu0 %870
      %872 = vmax.xlane.f32.xlu0 %v864
      %v873 = vpop.xlane.xlu0 %872
      %v874 = vsub.f32 %v857, %v867
      %v875 = vsub.f32 %v859, %v869
      %v876 = vsub.f32 %v862, %v871
      %v877 = vsub.f32 %v864, %v873
      %v878 = vmul.f32 %v874, 1.442695
      %v879 = vpow.pop %v878
      %v880 = vmul.f32 %v875, 1.442695
      %v881 = vpow.pop %v880
      %v882 = vmul.f32 %v876, 1.442695
      %v883 = vpow.pop %v882
      %v884 = vmul.f32 %v877, 1.442695
      %v885 = vpow.pop %v884
      %886 = vadd.xlane.f32.xlu0 %v879
      %v887 = vpop.xlane.xlu0 %886
      %888 = vadd.xlane.f32.xlu0 %v881
      %v889 = vpop.xlane.xlu0 %888
      %890 = vadd.xlane.f32.xlu0 %v883
      %v891 = vpop.xlane.xlu0 %890
      %892 = vadd.xlane.f32.xlu0 %v885
      %v893 = vpop.xlane.xlu0 %892
      %v894 = vlog2.pop %v887
      %v895 = vmul.f32 %v894, 0.6931472
      %v896 = vlog2.pop %v889
      %v897 = vmul.f32 %v896, 0.6931472
      %v898 = vlog2.pop %v891
      %v899 = vmul.f32 %v898, 0.6931472
      %v900 = vlog2.pop %v893
      %v901 = vmul.f32 %v900, 0.6931472
      %v902 = vsub.f32 %v874, %v895
      %v903 = vsub.f32 %v875, %v897
      %v904 = vsub.f32 %v876, %v899
      %v905 = vsub.f32 %v877, %v901
      %906 = vst [vmem:[%s217] sm:$0xff] %v902
      %907 = vst [vmem:[%s217 + $0x8] sm:$0xff] %v903
      %908 = vst [vmem:[%s217 + $0x10] sm:$0xff] %v904
      %909 = vst [vmem:[%s217 + $0x18] sm:$0xff] %v905
      %p910 = scmp.lt.s32.totalorder %s15, 1
      %s911 = scalar_select %p910, %s15, 1
      %s912 = smul.addr %s911, 4
      %s913 = smul.addr %s912, 8
      %s914 = scalar_lea.vmem %s4, %s913
      // Predicated region
      $region37: #{feature_extractor_forward.1} parent=35 // pred_check
        %p915 = pneg %p127
      $region38: #{feature_extractor_forward.1} parent=35 // pred_check_branch
        %917 = sbr.rel (%p915) target = $region40
      $region39: #{feature_extractor_forward.1} parent=35 // pred_region
        _
      $region40: #{feature_extractor_forward.1} parent=35 // pred_fallthru
        _
    $region36: #{feature_extractor_forward.1} parent=5 // pred_fallthru
      _
    %p918 = scmp.le.s32.totalorder 2, %s10
    // Predicated region
    $region41: #{feature_extractor_forward.1} parent=5 // pred_check
      %p919 = pneg %p918
    $region42: #{feature_extractor_forward.1} parent=5 // pred_check_branch
      %921 = sbr.rel (%p919) target = $region44
    $region43: #{feature_extractor_forward.1} parent=5 // pred_region
      %s922 = ssub.s32 %s10, 2
      // Predicated region
      $region45: #{feature_extractor_forward.1} parent=43 // pred_check
        %p923 = pneg %p133
      $region46: #{feature_extractor_forward.1} parent=43 // pred_check_branch
        %925 = sbr.rel (%p923) target = $region48
      $region47: #{feature_extractor_forward.1} parent=43 // pred_region
        %p926 = scmp.lt.s32.totalorder %s16, 1
        %s927 = scalar_select %p926, %s16, 1
        %s928 = smul.addr %s927, 4
        %s929 = smul.addr %s928, 8
        %s930 = scalar_lea.vmem %s4, %s929
      $region48: #{feature_extractor_forward.1} parent=43 // pred_fallthru
        _
    $region44: #{feature_extractor_forward.1} parent=5 // pred_fallthru
      _
  $region6: #{feature_extractor_forward.1} parent=0 // loop_footer
    %s14 = sadd.s32 1, %s10
  $region7: #{feature_extractor_forward.1} parent=0 // loop_footer_branch
    %9 = sbr.rel target = $region3
  $region8: #{feature_extractor_forward.1} parent=0 // loop_exit
    _

</llo_original>
